<compile_context>
chip_gen: v5e
topology: v5e:2x2
jax: 0.10.0
libtpu: 0.0.40
codegen_flags: <defaults>
</compile_context>

<pallas_src>
import functools

import jax
import jax.numpy as jnp
import numpy as np
from jax.experimental import pallas as pl
from jax.experimental.pallas import tpu as pltpu


# ---------------------------------------------------------------------------
# Fused kernel: conv_a (1x1 mfm) + kxk mfm conv, one image per grid step.
# Layout is channel-major: activations are (C, H*W) with H*W on the lane dim.
# ---------------------------------------------------------------------------
def _group_fused_kernel(x_ref, wa_ref, ba_ref, wb_ref, bb_ref, m_ref, o_ref,
                        *, c_mid, c_out, shifts):
    x = x_ref[...].astype(jnp.bfloat16)                        # (Cin, HW)

    # ---- stage 1: conv_a = mfm(Cin, Cmid, 1, 1, 0) -----------------------
    ya = jnp.dot(wa_ref[...], x, preferred_element_type=jnp.float32)
    ya = ya + ba_ref[...]                                      # (2*Cmid, HW)
    a = jnp.maximum(ya[:c_mid], ya[c_mid:])                    # (Cmid, HW) f32

    # ---- stage 2: conv = mfm(Cmid, Cout, k, 1, (k-1)//2) -----------------
    # im2col fused in-register: tap (i, j) == lane-roll of the flattened
    # activation by -(di*W + dj); out-of-image lanes are zeroed by the mask
    # (this reproduces the conv's zero padding exactly).  All taps are stacked
    # along the contraction dim so the whole kxk conv is a SINGLE MXU matmul.
    taps = [pltpu.roll(a, s, 1) if s else a for s in shifts]   # kk x (Cmid, HW)
    g = jnp.concatenate(taps, axis=0)                          # (kk*Cmid, HW)
    g = (g * m_ref[...]).astype(jnp.bfloat16)
    y = jnp.dot(wb_ref[...], g, preferred_element_type=jnp.float32)
    y = y + bb_ref[...]                                        # (2*Cout, HW)
    o_ref[...] = jnp.maximum(y[:c_out], y[c_out:]).astype(o_ref.dtype)


def _group_fused(x_nchw, params):
    n, cin, h, w = x_nchw.shape
    hw = h * w
    wa4, wb4 = params["conv_a_w"], params["conv_w"]
    c_mid = wa4.shape[0] // 2
    c_out = wb4.shape[0] // 2
    k = wb4.shape[-1]
    pad = params["padding"]
    kk = k * k

    wa = wa4.reshape(2 * c_mid, cin).astype(jnp.bfloat16)
    ba = params["conv_a_b"].reshape(2 * c_mid, 1).astype(jnp.float32)
    # (O, C, kh, kw) -> (O, kh*kw*C): contraction index = tap*Cmid + channel,
    # matching the in-kernel tap concatenation order.
    wb = jnp.transpose(wb4, (0, 2, 3, 1)).reshape(2 * c_out, kk * c_mid)
    wb = wb.astype(jnp.bfloat16)
    bb = params["conv_b"].reshape(2 * c_out, 1).astype(jnp.float32)

    # Static per-tap lane shifts + validity masks over the flattened H*W dim.
    shifts = []
    mask_taps = np.zeros((kk, hw), np.float32)
    rr = np.arange(h)[:, None]
    cc = np.arange(w)[None, :]
    for i in range(k):
        for j in range(k):
            di, dj = i - pad, j - pad
            valid = ((rr + di >= 0) & (rr + di < h) &
                     (cc + dj >= 0) & (cc + dj < w))
            mask_taps[i * k + j] = valid.reshape(hw)
            shifts.append((-(di * w + dj)) % hw)
    # Expand to the stacked contraction layout: row tap*Cmid + c == tap mask.
    masks = jnp.asarray(np.repeat(mask_taps, c_mid, axis=0))    # (kk*Cmid, HW)

    kernel = functools.partial(_group_fused_kernel, c_mid=c_mid, c_out=c_out,
                               shifts=tuple(shifts))
    out = pl.pallas_call(
        kernel,
        out_shape=jax.ShapeDtypeStruct((n, c_out, hw), jnp.float32),
        grid=(n,),
        in_specs=[
            pl.BlockSpec((None, cin, hw), lambda b: (b, 0, 0)),          # x
            pl.BlockSpec((2 * c_mid, cin), lambda b: (0, 0)),            # conv_a w
            pl.BlockSpec((2 * c_mid, 1), lambda b: (0, 0)),              # conv_a b
            pl.BlockSpec((2 * c_out, kk * c_mid), lambda b: (0, 0)),     # conv w
            pl.BlockSpec((2 * c_out, 1), lambda b: (0, 0)),              # conv b
            pl.BlockSpec((kk * c_mid, hw), lambda b: (0, 0)),            # tap masks
        ],
        out_specs=pl.BlockSpec((None, c_out, hw), lambda b: (b, 0, 0)),
        compiler_params=pltpu.CompilerParams(
            dimension_semantics=("parallel",)),
    )(x_nchw.reshape(n, cin, hw), wa, ba, wb, bb, masks)
    return out.reshape(n, c_out, h, w)


# ---------------------------------------------------------------------------
# General fallback (stride != 1 or padding != (k-1)/2): JAX-side im2col in
# channel-major layout + fused matmul/bias/max kernel with lane-dense output.
# ---------------------------------------------------------------------------
def _mfm_matmul_kernel(xt_ref, w_ref, b_ref, o_ref, *, c_out):
    y = jnp.dot(w_ref[...], xt_ref[...], preferred_element_type=jnp.float32)
    y = y + b_ref[...]
    o_ref[...] = jnp.maximum(y[:c_out], y[c_out:]).astype(o_ref.dtype)


def _mfm_conv_general(x, w, b, stride, padding, *, tn=512):
    n, cin, h, wd = x.shape
    two_cout, _, kh, kw = w.shape
    c_out = two_cout // 2
    ho = (h + 2 * padding - kh) // stride + 1
    wo = (wd + 2 * padding - kw) // stride + 1

    # im2col, channel-major: (K, M) with K = kh*kw*cin, M = n*ho*wo.
    xc = jnp.transpose(x, (1, 0, 2, 3)).astype(jnp.bfloat16)    # (Cin, N, H, W)
    xp = jnp.pad(xc, ((0, 0), (0, 0), (padding, padding), (padding, padding)))
    taps = []
    for i in range(kh):
        for j in range(kw):
            taps.append(xp[:, :, i:i + stride * ho:stride, j:j + stride * wo:stride])
    patches = jnp.stack(taps, axis=0)                           # (KK, Cin, N, ho, wo)
    K = kh * kw * cin
    M = n * ho * wo
    xt = patches.reshape(K, M)

    w2 = jnp.transpose(w, (0, 2, 3, 1)).reshape(two_cout, K).astype(jnp.bfloat16)
    b2 = b.reshape(two_cout, 1).astype(jnp.float32)

    tn = min(tn, pl.cdiv(M, 128) * 128)
    mp = pl.cdiv(M, tn) * tn
    if mp != M:
        xt = jnp.pad(xt, ((0, 0), (0, mp - M)))

    out = pl.pallas_call(
        functools.partial(_mfm_matmul_kernel, c_out=c_out),
        out_shape=jax.ShapeDtypeStruct((c_out, mp), jnp.float32),
        grid=(mp // tn,),
        in_specs=[
            pl.BlockSpec((K, tn), lambda i: (0, i)),
            pl.BlockSpec((two_cout, K), lambda i: (0, 0)),
            pl.BlockSpec((two_cout, 1), lambda i: (0, 0)),
        ],
        out_specs=pl.BlockSpec((c_out, tn), lambda i: (0, i)),
        compiler_params=pltpu.CompilerParams(
            dimension_semantics=("parallel",)),
    )(xt, w2, b2)
    out = out[:, :M].reshape(c_out, n, ho, wo)
    return jnp.transpose(out, (1, 0, 2, 3))


# ---------------------------------------------------------------------------
# group.forward: conv_a (1x1 mfm) -> conv (kxk mfm).  NCHW in / NCHW out.
# ---------------------------------------------------------------------------
def group_forward(x_nchw, params):
    kh, kw = params["conv_w"].shape[-2:]
    stride, padding = params["stride"], params["padding"]
    if stride == 1 and kh == kw and 2 * padding == kh - 1:
        return _group_fused(x_nchw, params)
    # TODO(synk): general stride/padding uses the im2col fallback path rather
    # than the single fully-fused kernel (LCNN's `group` always hits the fused
    # path: k=3, stride=1, padding=1).
    y = _mfm_conv_general(x_nchw, params["conv_a_w"], params["conv_a_b"], 1, 0)
    return _mfm_conv_general(y, params["conv_w"], params["conv_b"],
                             stride, padding)


# ---------------------------------------------------------------------------
# Pure-JAX reference (for self-check)
# ---------------------------------------------------------------------------
def _ref_mfm_conv_nchw(x, w, b, stride, padding):
    y = jax.lax.conv_general_dilated(
        x, w, window_strides=(stride, stride),
        padding=[(padding, padding), (padding, padding)],
        dimension_numbers=("NCHW", "OIHW", "NCHW"))
    y = y + b.reshape(1, -1, 1, 1)
    cout = w.shape[0] // 2
    return jnp.maximum(y[:, :cout], y[:, cout:])


def _ref_group(x, params):
    x = _ref_mfm_conv_nchw(x, params["conv_a_w"], params["conv_a_b"], 1, 0)
    x = _ref_mfm_conv_nchw(x, params["conv_w"], params["conv_b"],
                           params["stride"], params["padding"])
    return x


if __name__ == "__main__":
    # group(in_channels=4, out_channels=8, kernel_size=3, stride=1, padding=1)
    in_channels, out_channels = 4, 8
    kernel_size, stride, padding = 3, 1, 1
    N, H, W = 2, 16, 16

    key = jax.random.PRNGKey(0)
    k0, k1, k2, k3, k4 = jax.random.split(key, 5)

    params = {
        # conv_a: mfm(Cin, Cin, 1, 1, 0) -> Conv2d(Cin, 2*Cin, 1)
        "conv_a_w": 0.1 * jax.random.normal(
            k0, (2 * in_channels, in_channels, 1, 1), jnp.float32),
        "conv_a_b": 0.1 * jax.random.normal(k1, (2 * in_channels,), jnp.float32),
        # conv: mfm(Cin, Cout, k, s, p) -> Conv2d(Cin, 2*Cout, k, s, p)
        "conv_w": 0.1 * jax.random.normal(
            k2, (2 * out_channels, in_channels, kernel_size, kernel_size),
            jnp.float32),
        "conv_b": 0.1 * jax.random.normal(k3, (2 * out_channels,), jnp.float32),
        "stride": stride,
        "padding": padding,
    }

    x = jax.random.normal(k4, (N, in_channels, H, W), jnp.float32)

    # Fused path (the config LCNN actually uses).
    out = jax.block_until_ready(group_forward(x, params))
    ref = _ref_group(x, params)
    assert out.shape == ref.shape == (N, out_channels, H, W), (out.shape, ref.shape)
    assert jnp.allclose(out, ref, atol=5e-2, rtol=5e-2), "fused path mismatch"

    # General fallback path (stride=2, padding=0) for completeness.
    params2 = dict(params, stride=2, padding=0)
    out2 = jax.block_until_ready(group_forward(x, params2))
    ref2 = _ref_group(x, params2)
    assert out2.shape == ref2.shape, (out2.shape, ref2.shape)
    assert jnp.allclose(out2, ref2, atol=5e-2, rtol=5e-2), "fallback mismatch"

    print("KERNEL_OK")
</pallas_src>

<mosaic_0001>
module attributes {stable_mosaic.version = 11 : i64} {
  func.func @_group_fused_kernel(%arg0: i32, %arg1: memref<1x4x256xf32, #tpu.memory_space<vmem>>, %arg2: memref<8x4xbf16, #tpu.memory_space<vmem>>, %arg3: memref<8x1xf32, #tpu.memory_space<vmem>>, %arg4: memref<16x36xbf16, #tpu.memory_space<vmem>>, %arg5: memref<16x1xf32, #tpu.memory_space<vmem>>, %arg6: memref<36x256xf32, #tpu.memory_space<vmem>>, %arg7: memref<1x8x256xf32, #tpu.memory_space<vmem>>) attributes {dimension_semantics = [#tpu.dimension_semantics<parallel>], iteration_bounds = array<i64: 2>, scalar_prefetch = 0 : i64, scratch_operands = 0 : i64, tpu.core_type = #tpu.core_type<tc>, window_params = [{transform_indices = @transform_0, window_bounds = array<i64: 1, 4, 256>}, {pipeline_mode = #tpu.pipeline_mode<synchronous>, transform_indices = @transform_1, window_bounds = array<i64: 8, 4>}, {pipeline_mode = #tpu.pipeline_mode<synchronous>, transform_indices = @transform_2, window_bounds = array<i64: 8, 1>}, {pipeline_mode = #tpu.pipeline_mode<synchronous>, transform_indices = @transform_3, window_bounds = array<i64: 16, 36>}, {pipeline_mode = #tpu.pipeline_mode<synchronous>, transform_indices = @transform_4, window_bounds = array<i64: 16, 1>}, {pipeline_mode = #tpu.pipeline_mode<synchronous>, transform_indices = @transform_5, window_bounds = array<i64: 36, 256>}, {transform_indices = @transform_6, window_bounds = array<i64: 1, 8, 256>}]} {
    %c0 = arith.constant 0 : index
    %c0_0 = arith.constant 0 : index
    %c0_1 = arith.constant 0 : index
    %0 = vector.load %arg1[%c0, %c0_0, %c0_1] : memref<1x4x256xf32, #tpu.memory_space<vmem>>, vector<1x4x256xf32>
    %1 = vector.shape_cast %0 : vector<1x4x256xf32> to vector<4x256xf32>
    %2 = arith.truncf %1 : vector<4x256xf32> to vector<4x256xbf16>
    %c0_2 = arith.constant 0 : index
    %c0_3 = arith.constant 0 : index
    %3 = vector.load %arg2[%c0_2, %c0_3] : memref<8x4xbf16, #tpu.memory_space<vmem>>, vector<8x4xbf16>
    %cst = arith.constant dense<0.000000e+00> : vector<8x256xf32>
    %4 = tpu.matmul %3, %2, %cst {dimension_numbers = #tpu.dot_dimension_numbers<[1], [0], [0], [1], [0, 0, 1, 1], [], []>} : vector<8x4xbf16>, vector<4x256xbf16>, vector<8x256xf32> -> vector<8x256xf32>
    %c0_4 = arith.constant 0 : index
    %c0_5 = arith.constant 0 : index
    %5 = vector.load %arg3[%c0_4, %c0_5] : memref<8x1xf32, #tpu.memory_space<vmem>>, vector<8x1xf32>
    %6 = vector.broadcast %5 : vector<8x1xf32> to vector<8x256xf32>
    %7 = arith.addf %4, %6 : vector<8x256xf32>
    %8 = vector.extract_strided_slice %7 {offsets = [0, 0], sizes = [4, 256], strides = [1, 1]} : vector<8x256xf32> to vector<4x256xf32>
    %9 = vector.extract_strided_slice %7 {offsets = [4, 0], sizes = [4, 256], strides = [1, 1]} : vector<8x256xf32> to vector<4x256xf32>
    %10 = arith.maximumf %8, %9 : vector<4x256xf32>
    %c17_i32 = arith.constant 17 : i32
    %11 = tpu.dynamic_rotate %10 by %c17_i32 dim 1 : vector<4x256xf32>, i32 -> vector<4x256xf32>
    %c16_i32 = arith.constant 16 : i32
    %12 = tpu.dynamic_rotate %10 by %c16_i32 dim 1 : vector<4x256xf32>, i32 -> vector<4x256xf32>
    %c15_i32 = arith.constant 15 : i32
    %13 = tpu.dynamic_rotate %10 by %c15_i32 dim 1 : vector<4x256xf32>, i32 -> vector<4x256xf32>
    %c1_i32 = arith.constant 1 : i32
    %14 = tpu.dynamic_rotate %10 by %c1_i32 dim 1 : vector<4x256xf32>, i32 -> vector<4x256xf32>
    %c255_i32 = arith.constant 255 : i32
    %15 = tpu.dynamic_rotate %10 by %c255_i32 dim 1 : vector<4x256xf32>, i32 -> vector<4x256xf32>
    %c241_i32 = arith.constant 241 : i32
    %16 = tpu.dynamic_rotate %10 by %c241_i32 dim 1 : vector<4x256xf32>, i32 -> vector<4x256xf32>
    %c240_i32 = arith.constant 240 : i32
    %17 = tpu.dynamic_rotate %10 by %c240_i32 dim 1 : vector<4x256xf32>, i32 -> vector<4x256xf32>
    %c239_i32 = arith.constant 239 : i32
    %18 = tpu.dynamic_rotate %10 by %c239_i32 dim 1 : vector<4x256xf32>, i32 -> vector<4x256xf32>
    %19 = tpu.concatenate %11, %12, %13, %14, %10, %15, %16, %17, %18 in 0 : vector<4x256xf32>, vector<4x256xf32>, vector<4x256xf32>, vector<4x256xf32>, vector<4x256xf32>, vector<4x256xf32>, vector<4x256xf32>, vector<4x256xf32>, vector<4x256xf32> -> vector<36x256xf32>
    %c0_6 = arith.constant 0 : index
    %c0_7 = arith.constant 0 : index
    %20 = vector.load %arg6[%c0_6, %c0_7] : memref<36x256xf32, #tpu.memory_space<vmem>>, vector<36x256xf32>
    %21 = arith.mulf %19, %20 : vector<36x256xf32>
    %22 = arith.truncf %21 : vector<36x256xf32> to vector<36x256xbf16>
    %c0_8 = arith.constant 0 : index
    %c0_9 = arith.constant 0 : index
    %23 = vector.load %arg4[%c0_8, %c0_9] : memref<16x36xbf16, #tpu.memory_space<vmem>>, vector<16x36xbf16>
    %cst_10 = arith.constant dense<0.000000e+00> : vector<16x256xf32>
    %24 = tpu.matmul %23, %22, %cst_10 {dimension_numbers = #tpu.dot_dimension_numbers<[1], [0], [0], [1], [0, 0, 1, 1], [], []>} : vector<16x36xbf16>, vector<36x256xbf16>, vector<16x256xf32> -> vector<16x256xf32>
    %c0_11 = arith.constant 0 : index
    %c0_12 = arith.constant 0 : index
    %25 = vector.load %arg5[%c0_11, %c0_12] : memref<16x1xf32, #tpu.memory_space<vmem>>, vector<16x1xf32>
    %26 = vector.broadcast %25 : vector<16x1xf32> to vector<16x256xf32>
    %27 = arith.addf %24, %26 : vector<16x256xf32>
    %28 = vector.extract_strided_slice %27 {offsets = [0, 0], sizes = [8, 256], strides = [1, 1]} : vector<16x256xf32> to vector<8x256xf32>
    %29 = vector.extract_strided_slice %27 {offsets = [8, 0], sizes = [8, 256], strides = [1, 1]} : vector<16x256xf32> to vector<8x256xf32>
    %30 = arith.maximumf %28, %29 : vector<8x256xf32>
    %c0_13 = arith.constant 0 : index
    %c0_14 = arith.constant 0 : index
    %c0_15 = arith.constant 0 : index
    %31 = vector.load %arg7[%c0_13, %c0_14, %c0_15] : memref<1x8x256xf32, #tpu.memory_space<vmem>>, vector<1x8x256xf32>
    %32 = vector.shape_cast %31 : vector<1x8x256xf32> to vector<8x256xf32>
    %33 = vector.shape_cast %30 : vector<8x256xf32> to vector<1x8x256xf32>
    tpu.vector_store %arg7[%c0_13, %c0_14, %c0_15], %33 {strides = array<i32>} : memref<1x8x256xf32, #tpu.memory_space<vmem>>, vector<1x8x256xf32>,
    return
  }
  func.func @transform_0(%arg0: i32) -> (i32, i32, i32) {
    %c0_i32 = arith.constant 0 : i32
    %c0_i32_0 = arith.constant 0 : i32
    %c0_i32_1 = arith.constant 0 : i32
    return %arg0, %c0_i32, %c0_i32_0 : i32, i32, i32
  }
  func.func @transform_1(%arg0: i32) -> (i32, i32) {
    %c0_i32 = arith.constant 0 : i32
    %c0_i32_0 = arith.constant 0 : i32
    %c0_i32_1 = arith.constant 0 : i32
    return %c0_i32, %c0_i32_0 : i32, i32
  }
  func.func @transform_2(%arg0: i32) -> (i32, i32) {
    %c0_i32 = arith.constant 0 : i32
    %c0_i32_0 = arith.constant 0 : i32
    %c0_i32_1 = arith.constant 0 : i32
    return %c0_i32, %c0_i32_0 : i32, i32
  }
  func.func @transform_3(%arg0: i32) -> (i32, i32) {
    %c0_i32 = arith.constant 0 : i32
    %c0_i32_0 = arith.constant 0 : i32
    %c0_i32_1 = arith.constant 0 : i32
    return %c0_i32, %c0_i32_0 : i32, i32
  }
  func.func @transform_4(%arg0: i32) -> (i32, i32) {
    %c0_i32 = arith.constant 0 : i32
    %c0_i32_0 = arith.constant 0 : i32
    %c0_i32_1 = arith.constant 0 : i32
    return %c0_i32, %c0_i32_0 : i32, i32
  }
  func.func @transform_5(%arg0: i32) -> (i32, i32) {
    %c0_i32 = arith.constant 0 : i32
    %c0_i32_0 = arith.constant 0 : i32
    %c0_i32_1 = arith.constant 0 : i32
    return %c0_i32, %c0_i32_0 : i32, i32
  }
  func.func @transform_6(%arg0: i32) -> (i32, i32, i32) {
    %c0_i32 = arith.constant 0 : i32
    %c0_i32_0 = arith.constant 0 : i32
    %c0_i32_1 = arith.constant 0 : i32
    return %arg0, %c0_i32, %c0_i32_0 : i32, i32, i32
  }
}

</mosaic_0001>

<llo_original>
// kernel: tpu_custom_call.1
$region0: #{tpu_custom_call.1}
  #allocation0 [shape = 'u32[]', space=smem, size = 0x4, offset = 0x4, fixed_abs, tag = 'smem constant byte address 0x4 - core index']
  #allocation1 [shape = 'u32[72,128]{1,0:T(1,128)}', space=vmem, size = 0x9000, scoped, tag = 'internal scratch']
  %s0 = inlined_call_operand.vmem [shape: f32[2,4,256], index: 0, kind: input, shape index: {}]
  %s1 = inlined_call_operand.vmem [shape: bf16[8,4], index: 1, kind: input, shape index: {}]
  %s2 = inlined_call_operand.vmem [shape: f32[8,1], index: 2, kind: input, shape index: {}]
  %s3 = inlined_call_operand.vmem [shape: bf16[16,36], index: 3, kind: input, shape index: {}]
  %s4 = inlined_call_operand.vmem [shape: f32[16,1], index: 4, kind: input, shape index: {}]
  %s5 = inlined_call_operand.hbm [shape: f32[36,256], index: 5, kind: input, shape index: {}]
  %s6 = inlined_call_operand.hbm [shape: f32[2,8,256], index: 6, kind: output, shape index: {}]
  %s7 = sld [smem:[#allocation0]]
  $region61: #{tpu_custom_call.1} parent=0
    _
  %s9 = ssub.s32 1, %s7
  %s10 = scalar_select 0, %s9, %s7
  $region1: #{tpu_custom_call.1} parent=0
    #allocation2 [shape = 'u8[40960]{0}', space=vmem, size = 0xa000, scoped, tag = 'input window, operand 5, single buffered']
    #allocation3 [shape = 's32[2]{0}', space=sflag, size = 0x8, scoped, tag = 'scoped memory for tpu_custom_call.1']
    #allocation4 [shape = 's32[2]{0}', space=sflag, size = 0x8, scoped, tag = 'scoped memory for tpu_custom_call.1']
    #allocation5 [shape = 'u8[16384]{0}', space=vmem, size = 0x4000, scoped, tag = 'output window, operand 0']
    %11 = vsyncpa [#allocation3], 0
    %12 = vsyncpa [#allocation4], 0
    %s13 = scalar_lea.sflag [#allocation4], 1
    %14 = vsyncpa %s13, 0
    loop: start=0, step=1, limit=4
    $region2: #{tpu_custom_call.1} parent=1 // loop_pre_header
      _
    $region3: #{tpu_custom_call.1} parent=1 // loop_header
      %s16 = sphi 0, %s20
      %p17 = scmp.ge.s32.totalorder %s16, 4
      %s26 = sphi 0, %s28
      %s29 = sphi 0, %s26
      %s30 = sphi 0, %s29
      %s46 = sphi 0, %s30
      %s50 = sphi 0, %s50
      %s52 = sphi 0, %s50
      %s53 = sphi 0, %s52
      %s67 = sphi 0, %s53
      %s71 = sphi 0, %s71
      %s73 = sphi 0, %s71
      %s74 = sphi 0, %s73
      %s88 = sphi 0, %s74
      %s92 = sphi 0, %s92
      %s94 = sphi 0, %s92
      %s95 = sphi 0, %s94
      %s109 = sphi 0, %s95
      %s113 = sphi 0, %s113
      %s115 = sphi 0, %s113
      %s116 = sphi 0, %s115
      %s130 = sphi 0, %s116
      %s134 = sphi 0, %s134
      %s136 = sphi 0, %s134
      %s137 = sphi 0, %s136
      %s151 = sphi 0, %s137
      %s157 = sphi 0, %s159
      %s160 = sphi 0, %s157
      %s161 = sphi 0, %s160
      %s177 = sphi 0, %s161
    $region4: #{tpu_custom_call.1} parent=1 // loop_header_branch
      %19 = sbr.rel (%p17) target = $region8
    $region5: #{tpu_custom_call.1} parent=1 // loop_body
      %s21 = ssub.s32 %s16, 1
      %s22 = ssub.s32 %s16, 2
      %s23 = sadd.s32 %s16, 1
      %s24 = ssub.s32 %s16, %s23
      %p25 = scmp.eq.s32.totalorder %s24, 0
      %s27 = sadd.s32 %s26, 1
      %s28 = scalar_select %p25, %s26, %s27
      %p31 = pneg %p25
      %p32 = scmp.eq.s32.totalorder %s16, 1
      %p33 = por %p31, %p32
      %p34 = scmp.ne.s32.totalorder %s26, %s29
      %p35 = scmp.eq.s32.totalorder %s16, 0
      %p36 = por %p34, %p35
      %p37 = scmp.ne.s32.totalorder %s26, %s29
      %p38 = scmp.eq.s32.totalorder %s21, 1
      %p39 = por %p37, %p38
      %p40 = scmp.ne.s32.totalorder %s29, %s30
      %p41 = scmp.eq.s32.totalorder %s21, 0
      %p42 = por %p40, %p41
      %p43 = scmp.ne.s32.totalorder %s29, %s30
      %p44 = scmp.eq.s32.totalorder %s22, 1
      %p45 = por %p43, %p44
      %p47 = scmp.ne.s32.totalorder %s30, %s46
      %p48 = scmp.eq.s32.totalorder %s22, 0
      %p49 = por %p47, %p48
      %s51 = sadd.s32 %s50, 1
      %p54 = scmp.eq.s32.totalorder %s16, 1
      %p55 = scmp.ne.s32.totalorder %s50, %s52
      %p56 = scmp.eq.s32.totalorder %s16, 0
      %p57 = por %p55, %p56
      %p58 = scmp.ne.s32.totalorder %s50, %s52
      %p59 = scmp.eq.s32.totalorder %s21, 1
      %p60 = por %p58, %p59
      %p61 = scmp.ne.s32.totalorder %s52, %s53
      %p62 = scmp.eq.s32.totalorder %s21, 0
      %p63 = por %p61, %p62
      %p64 = scmp.ne.s32.totalorder %s52, %s53
      %p65 = scmp.eq.s32.totalorder %s22, 1
      %p66 = por %p64, %p65
      %p68 = scmp.ne.s32.totalorder %s53, %s67
      %p69 = scmp.eq.s32.totalorder %s22, 0
      %p70 = por %p68, %p69
      %s72 = sadd.s32 %s71, 1
      %p75 = scmp.eq.s32.totalorder %s16, 1
      %p76 = scmp.ne.s32.totalorder %s71, %s73
      %p77 = scmp.eq.s32.totalorder %s16, 0
      %p78 = por %p76, %p77
      %p79 = scmp.ne.s32.totalorder %s71, %s73
      %p80 = scmp.eq.s32.totalorder %s21, 1
      %p81 = por %p79, %p80
      %p82 = scmp.ne.s32.totalorder %s73, %s74
      %p83 = scmp.eq.s32.totalorder %s21, 0
      %p84 = por %p82, %p83
      %p85 = scmp.ne.s32.totalorder %s73, %s74
      %p86 = scmp.eq.s32.totalorder %s22, 1
      %p87 = por %p85, %p86
      %p89 = scmp.ne.s32.totalorder %s74, %s88
      %p90 = scmp.eq.s32.totalorder %s22, 0
      %p91 = por %p89, %p90
      %s93 = sadd.s32 %s92, 1
      %p96 = scmp.eq.s32.totalorder %s16, 1
      %p97 = scmp.ne.s32.totalorder %s92, %s94
      %p98 = scmp.eq.s32.totalorder %s16, 0
      %p99 = por %p97, %p98
      %p100 = scmp.ne.s32.totalorder %s92, %s94
      %p101 = scmp.eq.s32.totalorder %s21, 1
      %p102 = por %p100, %p101
      %p103 = scmp.ne.s32.totalorder %s94, %s95
      %p104 = scmp.eq.s32.totalorder %s21, 0
      %p105 = por %p103, %p104
      %p106 = scmp.ne.s32.totalorder %s94, %s95
      %p107 = scmp.eq.s32.totalorder %s22, 1
      %p108 = por %p106, %p107
      %p110 = scmp.ne.s32.totalorder %s95, %s109
      %p111 = scmp.eq.s32.totalorder %s22, 0
      %p112 = por %p110, %p111
      %s114 = sadd.s32 %s113, 1
      %p117 = scmp.eq.s32.totalorder %s16, 1
      %p118 = scmp.ne.s32.totalorder %s113, %s115
      %p119 = scmp.eq.s32.totalorder %s16, 0
      %p120 = por %p118, %p119
      %p121 = scmp.ne.s32.totalorder %s113, %s115
      %p122 = scmp.eq.s32.totalorder %s21, 1
      %p123 = por %p121, %p122
      %p124 = scmp.ne.s32.totalorder %s115, %s116
      %p125 = scmp.eq.s32.totalorder %s21, 0
      %p126 = por %p124, %p125
      %p127 = scmp.ne.s32.totalorder %s115, %s116
      %p128 = scmp.eq.s32.totalorder %s22, 1
      %p129 = por %p127, %p128
      %p131 = scmp.ne.s32.totalorder %s116, %s130
      %p132 = scmp.eq.s32.totalorder %s22, 0
      %p133 = por %p131, %p132
      %s135 = sadd.s32 %s134, 1
      %p138 = scmp.eq.s32.totalorder %s16, 1
      %p139 = scmp.ne.s32.totalorder %s134, %s136
      %p140 = scmp.eq.s32.totalorder %s16, 0
      %p141 = por %p139, %p140
      %p142 = scmp.ne.s32.totalorder %s134, %s136
      %p143 = scmp.eq.s32.totalorder %s21, 1
      %p144 = por %p142, %p143
      %p145 = scmp.ne.s32.totalorder %s136, %s137
      %p146 = scmp.eq.s32.totalorder %s21, 0
      %p147 = por %p145, %p146
      %p148 = scmp.ne.s32.totalorder %s136, %s137
      %p149 = scmp.eq.s32.totalorder %s22, 1
      %p150 = por %p148, %p149
      %p152 = scmp.ne.s32.totalorder %s137, %s151
      %p153 = scmp.eq.s32.totalorder %s22, 0
      %p154 = por %p152, %p153
      %s155 = ssub.s32 %s16, %s23
      %p156 = scmp.eq.s32.totalorder %s155, 0
      %s158 = sadd.s32 %s157, 1
      %s159 = scalar_select %p156, %s157, %s158
      %p162 = pneg %p156
      %p163 = scmp.eq.s32.totalorder %s16, 1
      %p164 = por %p162, %p163
      %p165 = scmp.ne.s32.totalorder %s157, %s160
      %p166 = scmp.eq.s32.totalorder %s16, 0
      %p167 = por %p165, %p166
      %p168 = scmp.ne.s32.totalorder %s157, %s160
      %p169 = scmp.eq.s32.totalorder %s21, 1
      %p170 = por %p168, %p169
      %p171 = scmp.ne.s32.totalorder %s160, %s161
      %p172 = scmp.eq.s32.totalorder %s21, 0
      %p173 = por %p171, %p172
      %p174 = scmp.ne.s32.totalorder %s160, %s161
      %p175 = scmp.eq.s32.totalorder %s22, 1
      %p176 = por %p174, %p175
      %p178 = scmp.ne.s32.totalorder %s161, %s177
      %p179 = scmp.eq.s32.totalorder %s22, 0
      %p180 = por %p178, %p179
      %p181 = scmp.le.s32.totalorder 1, %s16
      %p182 = scmp.lt.s32.totalorder %s16, 3
      %p183 = pnand %p181, %p182
      %p184 = pneg %p183
      // Predicated region
      $region9: #{tpu_custom_call.1} parent=5 // pred_check
        _
      $region10: #{tpu_custom_call.1} parent=5 // pred_check_branch
        %186 = sbr.rel (%p183) target = $region12
      $region11: #{tpu_custom_call.1} parent=5 // pred_region
        %s187 = ssub.s32 %s16, 1
        // Predicated region
        $region13: #{tpu_custom_call.1} parent=11 // pred_check
          %p188 = pneg %p63
        $region14: #{tpu_custom_call.1} parent=11 // pred_check_branch
          %190 = sbr.rel (%p188) target = $region16
        $region15: #{tpu_custom_call.1} parent=11 // pred_region
          _
        $region16: #{tpu_custom_call.1} parent=11 // pred_fallthru
          _
        // Predicated region
        $region17: #{tpu_custom_call.1} parent=11 // pred_check
          %p191 = pneg %p84
        $region18: #{tpu_custom_call.1} parent=11 // pred_check_branch
          %193 = sbr.rel (%p191) target = $region20
        $region19: #{tpu_custom_call.1} parent=11 // pred_region
          _
        $region20: #{tpu_custom_call.1} parent=11 // pred_fallthru
          _
        // Predicated region
        $region21: #{tpu_custom_call.1} parent=11 // pred_check
          %p194 = pneg %p105
        $region22: #{tpu_custom_call.1} parent=11 // pred_check_branch
          %196 = sbr.rel (%p194) target = $region24
        $region23: #{tpu_custom_call.1} parent=11 // pred_region
          _
        $region24: #{tpu_custom_call.1} parent=11 // pred_fallthru
          _
        // Predicated region
        $region25: #{tpu_custom_call.1} parent=11 // pred_check
          %p197 = pneg %p126
        $region26: #{tpu_custom_call.1} parent=11 // pred_check_branch
          %199 = sbr.rel (%p197) target = $region28
        $region27: #{tpu_custom_call.1} parent=11 // pred_region
          _
        $region28: #{tpu_custom_call.1} parent=11 // pred_fallthru
          _
        // Predicated region
        $region29: #{tpu_custom_call.1} parent=11 // pred_check
          %p200 = pneg %p147
        $region30: #{tpu_custom_call.1} parent=11 // pred_check_branch
          %202 = sbr.rel (%p200) target = $region32
        $region31: #{tpu_custom_call.1} parent=11 // pred_region
          %204 = vsyncadd [#allocation3], 0
          %s205 = sshll.u32 %s5, 4
          %s206 = int_to_ptr.hbm [resolvable:$true] %s205
          %s207 = sshll.u32 [#allocation2], 4
          %s208 = int_to_ptr.vmem [resolvable:$true] %s207
          %213 = dma.hbm_to_vmem [thread:$0]  %s206, 1280, %s208, [#allocation3], 256, 256, 16
        $region32: #{tpu_custom_call.1} parent=11 // pred_fallthru
          _
      $region12: #{tpu_custom_call.1} parent=5 // pred_fallthru
        _
      %p214 = scmp.lt.s32.totalorder %s16, 2
      // Predicated region
      $region33: #{tpu_custom_call.1} parent=5 // pred_check
        %p215 = pneg %p214
      $region34: #{tpu_custom_call.1} parent=5 // pred_check_branch
        %217 = sbr.rel (%p215) target = $region36
      $region35: #{tpu_custom_call.1} parent=5 // pred_region
        // Predicated region
        $region37: #{tpu_custom_call.1} parent=35 // pred_check
          %p218 = pneg %p36
        $region38: #{tpu_custom_call.1} parent=35 // pred_check_branch
          %220 = sbr.rel (%p218) target = $region40
        $region39: #{tpu_custom_call.1} parent=35 // pred_region
          %p221 = scmp.lt.s32.totalorder %s16, 1
          %s222 = scalar_select %p221, %s16, 1
          %s223 = smul.addr %s222, 2
          %s224 = smul.addr %s223, 4
          %s225 = scalar_lea.vmem %s0, %s224
        $region40: #{tpu_custom_call.1} parent=35 // pred_fallthru
          _
      $region36: #{tpu_custom_call.1} parent=5 // pred_fallthru
        _
      %p226 = scmp.le.s32.totalorder 1, %s16
      %p227 = scmp.lt.s32.totalorder %s16, 3
      %p228 = pnand %p226, %p227
      %p229 = pneg %p228
      // Predicated region
      $region41: #{tpu_custom_call.1} parent=5 // pred_check
        _
      $region42: #{tpu_custom_call.1} parent=5 // pred_check_branch
        %231 = sbr.rel (%p228) target = $region44
      $region43: #{tpu_custom_call.1} parent=5 // pred_region
        %s232 = ssub.s32 %s16, 1
        // Predicated region
        $region45: #{tpu_custom_call.1} parent=43 // pred_check
          %p233 = pneg %p147
        $region46: #{tpu_custom_call.1} parent=43 // pred_check_branch
          %235 = sbr.rel (%p233) target = $region48
        $region47: #{tpu_custom_call.1} parent=43 // pred_region
          %237 = dma.done [#allocation3], 1280
        $region48: #{tpu_custom_call.1} parent=43 // pred_fallthru
          _
        %p238 = scmp.lt.s32.totalorder %s21, 1
        %s239 = scalar_select %p238, %s21, 1
        %s240 = smul.addr %s239, 2
        %s241 = smul.addr %s240, 4
        %s242 = scalar_lea.vmem %s0, %s241
        %p243 = pneg %p42
        %p244 = pneg %p39
        %p245 = pneg %p63
        %p246 = pneg %p60
        %p247 = pneg %p84
        %p248 = pneg %p81
        %p249 = pneg %p105
        %p250 = pneg %p102
        %p251 = pneg %p126
        %p252 = pneg %p123
        %p253 = pneg %p147
        %p254 = pneg %p144
        %p255 = pneg %p173
        %p256 = pneg %p170
        %s257 = sand.u32 %s160, 1
        %s258 = scalar_lea.sflag [#allocation4], %s257
        %s259 = sand.u32 %s160, 1
        %s260 = smul.addr %s259, 16
        %s261 = scalar_lea.vmem [#allocation5], %s260
        %p262 = scmp.lt.s32.totalorder %s21, 1
        %s263 = scalar_select %p262, %s21, 1
        %s264 = smul.addr %s263, 2
        %s265 = smul.addr %s264, 4
        %s266 = scalar_lea.vmem %s0, %s265
        %v268 = vld [vmem:[%s266] sm:$0xff]
        %270 = vst [vmem:[#allocation1] ss:$2 sm:$0xff] %v268
        %v271 = vld.sshfl [vmem:[#allocation1] sm:$0xff pattern:$0x75316420]
        %v272 = vld.sshfl [vmem:[#allocation1 + $0x8] sm:$0xff pattern:$0x75316420]
        %v275 = vpack.c.bf16 %v271, %v271
        %v276 = vpack.c.bf16 %v272, %v272
        %v277 = vld [vmem:[%s1] sm:$0xf]
        %v278 = vld [vmem:[%s2] sm:$0xff]
        %280 = vset.pattern.permute.xlu0 0
        %281 = vperm.xlu0 %280, %v278
        %v282 = vpop.permute.xlu0 %281
        %vm284 = vcmask 31744
        %v286 = vsel %vm284, %v277, 0
        %vm288 = vcmask 1041408
        %v290 = vsel %vm288, %v275, 0
        %v293 = vsel %vm288, %v276, 0
        %295 = vmatpush.bf16.msra.mxu0 0
        %296 = vmatpush.bf16.msra.mxu0 0
        %297 = vmatpush.bf16.msra.mxu0 0
        %298 = vmatpush.bf16.msra.mxu0 0
        %299 = vmatpush.bf16.msra.mxu0 0
        %300 = vmatpush.bf16.msra.mxu0 0
        %301 = vmatpush.bf16.msra.mxu0 0
        %302 = vmatpush.bf16.msra.mxu0 %v290
        %303 = vmatmul.bf16.gmra.mxu0 %v286
        %v304 = vpop.f32.mrf.mxu0
        %v305 = vadd.f32 %v282, %v304
        %v306 = vpop.f32.mrf.mxu0
        %307 = vdwg.mxu0
        %308 = vmatpush.bf16.msra.mxu0 0
        %309 = vmatpush.bf16.msra.mxu0 0
        %310 = vmatpush.bf16.msra.mxu0 0
        %311 = vmatpush.bf16.msra.mxu0 0
        %312 = vmatpush.bf16.msra.mxu0 0
        %313 = vmatpush.bf16.msra.mxu0 0
        %314 = vmatpush.bf16.msra.mxu0 0
        %315 = vmatpush.bf16.msra.mxu0 %v293
        %316 = vmatmul.bf16.gmra.mxu0 %v286
        %v317 = vpop.f32.mrf.mxu0
        %v318 = vadd.f32 %v282, %v317
        %v319 = vpop.f32.mrf.mxu0
        %320 = vdwg.mxu0
        %v323 = vrot.slane %v305, 4
        %v324 = vrot.slane %v318, 4
        %v327 = vmax.f32 %v305, %v323
        %v328 = vmax.f32 %v318, %v324
        %329 = vrot.lane.b32.xlu0 %v327, 17
        %v330 = vpop.permute.xlu0 %329
        %331 = vrot.lane.b32.xlu0 %v328, 17
        %v332 = vpop.permute.xlu0 %331
        %v333 = vlaneseq
        %v334 = vand.u32 %v333, 127
        %vm335 = vcmp.lt.s32.totalorder %v334, 17
        %v336 = vsel %vm335, %v330, %v332
        %v337 = vsel %vm335, %v332, %v330
        %338 = vrot.lane.b32.xlu0 %v327, 16
        %v339 = vpop.permute.xlu0 %338
        %340 = vrot.lane.b32.xlu0 %v328, 16
        %v341 = vpop.permute.xlu0 %340
        %vm342 = vcmp.lt.s32.totalorder %v334, 16
        %v343 = vsel %vm342, %v339, %v341
        %v344 = vsel %vm342, %v341, %v339
        %345 = vrot.lane.b32.xlu0 %v327, 15
        %v346 = vpop.permute.xlu0 %345
        %347 = vrot.lane.b32.xlu0 %v328, 15
        %v348 = vpop.permute.xlu0 %347
        %vm349 = vcmp.lt.s32.totalorder %v334, 15
        %v350 = vsel %vm349, %v346, %v348
        %v351 = vsel %vm349, %v348, %v346
        %352 = vrot.lane.b32.xlu0 %v327, 1
        %v353 = vpop.permute.xlu0 %352
        %354 = vrot.lane.b32.xlu0 %v328, 1
        %v355 = vpop.permute.xlu0 %354
        %vm356 = vcmp.lt.s32.totalorder %v334, 1
        %v357 = vsel %vm356, %v353, %v355
        %v358 = vsel %vm356, %v355, %v353
        %359 = vrot.lane.b32.xlu0 %v327, 127
        %v360 = vpop.permute.xlu0 %359
        %361 = vrot.lane.b32.xlu0 %v328, 127
        %v362 = vpop.permute.xlu0 %361
        %vm363 = vcmp.lt.s32.totalorder %v334, 127
        %v364 = vsel %vm363, %v360, %v362
        %v365 = vsel %vm363, %v362, %v360
        %366 = vrot.lane.b32.xlu0 %v327, 113
        %v367 = vpop.permute.xlu0 %366
        %368 = vrot.lane.b32.xlu0 %v328, 113
        %v369 = vpop.permute.xlu0 %368
        %vm370 = vcmp.lt.s32.totalorder %v334, 113
        %v371 = vsel %vm370, %v367, %v369
        %v372 = vsel %vm370, %v369, %v367
        %373 = vrot.lane.b32.xlu0 %v327, 112
        %v374 = vpop.permute.xlu0 %373
        %375 = vrot.lane.b32.xlu0 %v328, 112
        %v376 = vpop.permute.xlu0 %375
        %vm377 = vcmp.lt.s32.totalorder %v334, 112
        %v378 = vsel %vm377, %v374, %v376
        %v379 = vsel %vm377, %v376, %v374
        %380 = vrot.lane.b32.xlu0 %v327, 111
        %v381 = vpop.permute.xlu0 %380
        %382 = vrot.lane.b32.xlu0 %v328, 111
        %v383 = vpop.permute.xlu0 %382
        %vm384 = vcmp.lt.s32.totalorder %v334, 111
        %v385 = vsel %vm384, %v381, %v383
        %v386 = vsel %vm384, %v383, %v381
        %v389 = vrot.slane %v344, 4
        %v390 = vrot.slane %v343, 4
        %v395 = vrot.slane %v358, 4
        %v396 = vrot.slane %v357, 4
        %v401 = vrot.slane %v364, 4
        %v402 = vrot.slane %v365, 4
        %v407 = vrot.slane %v378, 4
        %v408 = vrot.slane %v379, 4
        %vm411 = vcmask 1043456
        %v412 = vsel %vm411, %v337, %v389
        %v413 = vsel %vm411, %v336, %v390
        %v414 = vsel %vm411, %v351, %v395
        %v415 = vsel %vm411, %v350, %v396
        %v416 = vsel %vm411, %v327, %v401
        %v417 = vsel %vm411, %v328, %v402
        %v418 = vsel %vm411, %v371, %v407
        %v419 = vsel %vm411, %v372, %v408
        %v420 = vld [vmem:[#allocation2] sm:$0xff]
        %v421 = vld [vmem:[#allocation2 + $0x8] sm:$0xff]
        %v422 = vld [vmem:[#allocation2 + $0x10] sm:$0xff]
        %v423 = vld [vmem:[#allocation2 + $0x18] sm:$0xff]
        %v424 = vld [vmem:[#allocation2 + $0x20] sm:$0xff]
        %v425 = vld [vmem:[#allocation2 + $0x28] sm:$0xff]
        %v426 = vld [vmem:[#allocation2 + $0x30] sm:$0xff]
        %v427 = vld [vmem:[#allocation2 + $0x38] sm:$0xff]
        %v428 = vld [vmem:[#allocation2 + $0x40] sm:$0xf]
        %v429 = vld [vmem:[#allocation2 + $0x48] sm:$0xf]
        %v430 = vmul.f32 %v412, %v420
        %v431 = vmul.f32 %v413, %v421
        %v432 = vmul.f32 %v414, %v422
        %v433 = vmul.f32 %v415, %v423
        %v434 = vmul.f32 %v416, %v424
        %v435 = vmul.f32 %v417, %v425
        %v436 = vmul.f32 %v418, %v426
        %v437 = vmul.f32 %v419, %v427
        %v438 = vmul.f32 %v385, %v428
        %v439 = vmul.f32 %v386, %v429
        %v440 = vpack.c.bf16 %v432, %v430
        %v441 = vpack.c.bf16 %v433, %v431
        %v442 = vpack.c.bf16 %v436, %v434
        %v443 = vpack.c.bf16 %v437, %v435
        %v444 = vpack.c.bf16 %v438, %v438
        %v445 = vpack.c.bf16 %v439, %v439
        %v446 = vld [vmem:[%s3] sm:$0xf]
        %v447 = vld [vmem:[%s3 + $0x4] sm:$0xf]
        %v448 = vld [vmem:[%s4] sm:$0xff]
        %v449 = vld [vmem:[%s4 + $0x8] sm:$0xff]
        %451 = vset.pattern.permute.xlu0 0
        %452 = vperm.xlu0 %451, %v448
        %v453 = vpop.permute.xlu0 %452
        %456 = vset.pattern.permute.xlu0 0
        %457 = vperm.xlu0 %456, %v449
        %v458 = vpop.permute.xlu0 %457
        %v462 = vunpack.c.l.b16 %v446
        %v463 = vunpack.c.l.b16 %v447
        %v464 = vpack.c.b16 %v463, %v462
        %vm465 = vcmask 293888
        %v467 = vsel %vm465, %v464, 0
        %v470 = vsel %vm288, %v444, 0
        %v473 = vsel %vm288, %v445, 0
        %475 = vmatpush.bf16.msra.mxu0 0
        %476 = vmatpush.bf16.msra.mxu0 0
        %477 = vmatpush.bf16.msra.mxu0 0
        %478 = vmatpush.bf16.msra.mxu0 0
        %479 = vmatpush.bf16.msra.mxu0 0
        %480 = vmatpush.bf16.msra.mxu0 %v470
        %481 = vmatpush.bf16.msra.mxu0 %v442
        %482 = vmatpush.bf16.msra.mxu0 %v440
        %483 = vmatmul.bf16.gmra.mxu0 %v467
        %v484 = vpop.f32.mrf.mxu0
        %v485 = vadd.f32 %v453, %v484
        %v486 = vpop.f32.mrf.mxu0
        %v487 = vadd.f32 %v458, %v486
        %488 = vdwg.mxu0
        %489 = vmatpush.bf16.msra.mxu0 0
        %490 = vmatpush.bf16.msra.mxu0 0
        %491 = vmatpush.bf16.msra.mxu0 0
        %492 = vmatpush.bf16.msra.mxu0 0
        %493 = vmatpush.bf16.msra.mxu0 0
        %494 = vmatpush.bf16.msra.mxu0 %v473
        %495 = vmatpush.bf16.msra.mxu0 %v443
        %496 = vmatpush.bf16.msra.mxu0 %v441
        %497 = vmatmul.bf16.gmra.mxu0 %v467
        %v498 = vpop.f32.mrf.mxu0
        %v499 = vadd.f32 %v453, %v498
        %v500 = vpop.f32.mrf.mxu0
        %v501 = vadd.f32 %v458, %v500
        %502 = vdwg.mxu0
        %v503 = vmax.f32 %v485, %v487
        %v504 = vmax.f32 %v499, %v501
        %505 = vst [vmem:[%s261] sm:$0xff] %v503
        %506 = vst [vmem:[%s261 + $0x8] sm:$0xff] %v504
        %s507 = sand.u32 %s160, 1
        %s508 = scalar_lea.sflag [#allocation4], %s507
        %s509 = sand.u32 %s160, 1
        %s510 = smul.addr %s509, 16
        %s511 = scalar_lea.vmem [#allocation5], %s510
        // Predicated region
        $region49: #{tpu_custom_call.1} parent=43 // pred_check
          %p512 = pneg %p170
        $region50: #{tpu_custom_call.1} parent=43 // pred_check_branch
          %514 = sbr.rel (%p512) target = $region52
        $region51: #{tpu_custom_call.1} parent=43 // pred_region
          %516 = vsyncadd %s508, 0
          %s517 = smul.addr %s21, 2
          %s518 = smul.addr %s517, 8
          %s519 = scalar_lea.hbm %s6, %s518
          %s521 = sshll.u32 %s511, 4
          %s522 = int_to_ptr.vmem [resolvable:$true] %s521
          %s523 = sshll.u32 %s519, 4
          %s524 = int_to_ptr.hbm [resolvable:$true] %s523
          %526 = dma.vmem_to_hbm [thread:$0]  %s522, 256, %s524, %s508
        $region52: #{tpu_custom_call.1} parent=43 // pred_fallthru
          _
      $region44: #{tpu_custom_call.1} parent=5 // pred_fallthru
        _
      %p527 = scmp.le.s32.totalorder 2, %s16
      // Predicated region
      $region53: #{tpu_custom_call.1} parent=5 // pred_check
        %p528 = pneg %p527
      $region54: #{tpu_custom_call.1} parent=5 // pred_check_branch
        %530 = sbr.rel (%p528) target = $region56
      $region55: #{tpu_custom_call.1} parent=5 // pred_region
        %s531 = ssub.s32 %s16, 2
        // Predicated region
        $region57: #{tpu_custom_call.1} parent=55 // pred_check
          %p532 = pneg %p176
        $region58: #{tpu_custom_call.1} parent=55 // pred_check_branch
          %534 = sbr.rel (%p532) target = $region60
        $region59: #{tpu_custom_call.1} parent=55 // pred_region
          %s535 = sand.u32 %s161, 1
          %s536 = scalar_lea.sflag [#allocation4], %s535
          %s537 = sand.u32 %s161, 1
          %s538 = smul.addr %s537, 16
          %s539 = scalar_lea.vmem [#allocation5], %s538
          %541 = dma.done %s536, 256
        $region60: #{tpu_custom_call.1} parent=55 // pred_fallthru
          _
      $region56: #{tpu_custom_call.1} parent=5 // pred_fallthru
        _
    $region6: #{tpu_custom_call.1} parent=1 // loop_footer
      %s20 = sadd.s32 1, %s16
    $region7: #{tpu_custom_call.1} parent=1 // loop_footer_branch
      %15 = sbr.rel target = $region3
    $region8: #{tpu_custom_call.1} parent=1 // loop_exit
      _
    %542 = vsyncpa [#allocation3], 1
    %s543 = scalar_lea.sflag [#allocation3], 1
    %544 = vsyncpa %s543, 1
    %545 = vsyncpa [#allocation4], 1
    %s546 = scalar_lea.sflag [#allocation4], 1
    %547 = vsyncpa %s546, 1

</llo_original>
